<compile_context>
chip_gen: v7x
topology: tpu7x:2x2x1
jax: 0.10.0
libtpu: 0.0.40
codegen_flags: <defaults>
</compile_context>

<pallas_src>
import math
from functools import partial

import jax
import jax.numpy as jnp
from jax.experimental import pallas as pl
from jax.experimental.pallas import tpu as pltpu


# ----------------------------------------------------------------------------
# Pallas kernel: roll+mask im2col + one deep-K MXU matmul per grid step.
# ----------------------------------------------------------------------------
def _conv2d_kernel(x_ref, w_ref, b_ref, o_ref, *scratch, KH, KW, PH, PW,
                   H, W, NB, Cin, Cin_pad):
    # x_ref   : (NB, Cin, H*W)          NCHW input, flat spatial on lanes
    # w_ref   : (Cout, KH*KW*Cin_pad)   flattened weights, (kh, kw, cin) order
    # b_ref   : (Cout, 1)               bias (f32)
    # o_ref   : (NB, Cout, H*W)         lane-dense NCHW output
    # scratch : [img_ref] (only if Cin_pad != Cin), patch_ref
    if Cin_pad == Cin:
        (patch_ref,) = scratch
        img_ref = None
    else:
        img_ref, patch_ref = scratch

    L = H * W
    # Flat spatial index and column index, shared by all tap masks.
    m = jax.lax.broadcasted_iota(jnp.int32, (1, L), 1)
    if (W & (W - 1)) == 0:
        col = jnp.bitwise_and(m, W - 1)
    else:
        col = jax.lax.rem(m, W)

    if img_ref is not None:
        # Zero once per step so the Cin..Cin_pad padding rows stay zero.
        img_ref[...] = jnp.zeros(img_ref.shape, img_ref.dtype)

    # ---- roll+mask im2col: one full-vreg aligned store per (tap, image) ----
    for b in range(NB):
        if img_ref is None:
            img = x_ref[b]                          # (Cin_pad, L), Cin == Cin_pad
        else:
            img_ref[0:Cin, :] = x_ref[b]            # stage to 8-row aligned buffer
            img = img_ref[...]
        for kh in range(KH):
            for kw in range(KW):
                dh, dw = kh - PH, kw - PW
                delta = dh * W + dw                 # flat-index shift of this tap
                v = img if delta == 0 else pltpu.roll(img, shift=(-delta) % L,
                                                      axis=1)
                conds = []
                if dh > 0:
                    conds.append(m < (H - dh) * W)  # row i < H - dh
                if dh < 0:
                    conds.append(m >= (-dh) * W)    # row i >= -dh
                if dw > 0:
                    conds.append(col < (W - dw))    # col j < W - dw
                if dw < 0:
                    conds.append(col >= (-dw))      # col j >= -dw
                if conds:
                    mask = conds[0]
                    for c in conds[1:]:
                        mask = jnp.logical_and(mask, c)
                    v = jnp.where(mask, v, jnp.zeros_like(v))
                t = kh * KW + kw
                patch_ref[t * Cin_pad:(t + 1) * Cin_pad, b * L:(b + 1) * L] = v

    # ---- single deep-K contraction on the MXU + bias ------------------------
    acc = jnp.dot(w_ref[...], patch_ref[...], preferred_element_type=jnp.float32)
    acc = acc + b_ref[...]

    # ---- dense, lane-aligned output stores ----------------------------------
    for b in range(NB):
        o_ref[b] = acc[:, b * L:(b + 1) * L].astype(o_ref.dtype)


def _num_tensorcores() -> int:
    # v7x has two TensorCores per chip; v5e/v6e have one.
    try:
        kind = jax.devices()[0].device_kind.lower()
    except Exception:
        return 1
    return 2 if ("v7" in kind or "tpu7" in kind) else 1


# ----------------------------------------------------------------------------
# Wrapper: NCHW in / NCHW out.  Only free reshapes (and, rarely, a tiny pad /
# slice) outside the kernel.
# ----------------------------------------------------------------------------
def conv2d_pallas(x_nchw, weight_oikk, bias, padding, *, batch_block=None,
                  compute_dtype=None):
    N, Cin, H, W = x_nchw.shape
    Cout, Cin_w, KH, KW = weight_oikk.shape
    if Cin_w != Cin:
        raise NotImplementedError("groups != 1")  # TODO(synk): groups support.
    PH, PW = padding
    H_out = H + 2 * PH - KH + 1
    W_out = W + 2 * PW - KW + 1
    assert H_out > 0 and W_out > 0

    # Over-padded (> 'same') convs: pre-pad spatially so the in-kernel output
    # grid (Hk, Wk) covers (H_out, W_out).  'same' / 'valid' configs: no-op.
    pre_h = max(0, PH - (KH - 1) // 2)
    pre_w = max(0, PW - (KW - 1) // 2)
    if pre_h or pre_w:
        x_nchw = jnp.pad(x_nchw, ((0, 0), (0, 0), (pre_h, pre_h), (pre_w, pre_w)))
    Hk, Wk = H + 2 * pre_h, W + 2 * pre_w
    PHk, PWk = PH - pre_h, PW - pre_w
    assert H_out <= Hk and W_out <= Wk
    L = Hk * Wk

    out_dtype = x_nchw.dtype
    cdt = jnp.dtype(compute_dtype) if compute_dtype is not None else jnp.dtype(out_dtype)
    esize = cdt.itemsize
    sub = (8 * 4) // esize                      # sublane quantum: 8 f32 / 16 bf16
    Cin_pad = -(-Cin // sub) * sub
    K_pad = KH * KW * Cin_pad

    if bias is None:
        bias = jnp.zeros((Cout,), dtype=jnp.float32)

    ncores = _num_tensorcores()

    def vmem_need(nb):
        patch = K_pad * nb * L * esize
        img = (Cin_pad * L * esize) if Cin_pad != Cin else 0
        x_blk = 2 * nb * Cin * L * esize                      # double-buffered in
        o_blk = 2 * nb * Cout * L * jnp.dtype(out_dtype).itemsize  # double-buffered out
        w_blk = 2 * Cout * K_pad * esize
        acc = Cout * nb * L * 4
        return patch + img + x_blk + o_blk + w_blk + acc + (1 << 20)

    if batch_block is None:
        budget = 36 << 20
        # >=2 grid steps only matters on v7x (2 TCs); on v5e/v6e take the whole
        # batch in one step.  Cap NB so the unrolled tap loop stays small while
        # still giving the dot >=512 columns where possible.
        target = N if N < ncores else max(1, N // ncores)
        target = min(target, max(1, 4096 // L))
        nb = 1
        for cand in range(target, 0, -1):
            if N % cand == 0 and vmem_need(cand) <= budget:
                nb = cand
                break
        batch_block = nb
    NB = batch_block
    assert N % NB == 0
    # TODO(synk): for very large Cin*H*W even NB=1 can exceed VMEM; needs a
    # K-dim (tap / Cin-chunk) reduction grid axis with a pl.when-initialized
    # f32 accumulator.

    vmem_limit = int(min(max(2 * vmem_need(NB), 32 << 20), 48 << 20))

    # Weight (O, I, KH, KW) -> (O, KH*KW*Cin_pad), taps ordered (kh, kw, cin),
    # zero columns for padded input channels.  One-time tiny parameter prep.
    w_perm = jnp.transpose(weight_oikk.astype(cdt), (0, 2, 3, 1))
    if Cin_pad != Cin:
        w_perm = jnp.pad(w_perm, ((0, 0), (0, 0), (0, 0), (0, Cin_pad - Cin)))
    w_flat = w_perm.reshape(Cout, K_pad)
    b_col = bias.astype(jnp.float32).reshape(Cout, 1)
    x_flat = x_nchw.astype(cdt).reshape(N, Cin, L)          # free reshape

    kernel = partial(_conv2d_kernel, KH=KH, KW=KW, PH=PHk, PW=PWk,
                     H=Hk, W=Wk, NB=NB, Cin=Cin, Cin_pad=Cin_pad)

    scratch = []
    if Cin_pad != Cin:
        scratch.append(pltpu.VMEM((Cin_pad, L), cdt))
    scratch.append(pltpu.VMEM((K_pad, NB * L), cdt))

    out_flat = pl.pallas_call(
        kernel,
        out_shape=jax.ShapeDtypeStruct((N, Cout, L), out_dtype),
        grid_spec=pltpu.PrefetchScalarGridSpec(
            num_scalar_prefetch=0,
            grid=(N // NB,),
            in_specs=[
                pl.BlockSpec((NB, Cin, L), lambda g: (g, 0, 0)),
                pl.BlockSpec((Cout, K_pad), lambda g: (0, 0)),
                pl.BlockSpec((Cout, 1), lambda g: (0, 0)),
            ],
            out_specs=pl.BlockSpec((NB, Cout, L), lambda g: (g, 0, 0)),
            scratch_shapes=scratch,
        ),
        compiler_params=pltpu.CompilerParams(
            dimension_semantics=("parallel",),
            vmem_limit_bytes=vmem_limit),
    )(x_flat, w_flat, b_col)

    out = out_flat.reshape(N, Cout, Hk, Wk)
    if (Hk, Wk) != (H_out, W_out):
        out = out[:, :, :H_out, :W_out]       # cheap XLA slice of the wide grid
    return out


def conv2d_enhancement_forward(x_nchw, weight_oikk, bias, padding):
    # Forward of the module: stride=1, dilation=1, groups=1, zeros padding.
    # TODO(synk): stride/dilation != 1 and non-'zeros' padding_mode not implemented.
    return conv2d_pallas(x_nchw, weight_oikk, bias, padding)


# ----------------------------------------------------------------------------
# Parameter construction matching Conv2d_Enhancement.__init__ (plain JAX glue).
# ----------------------------------------------------------------------------
def _orth(weight):
    # torch: u, s, v = torch.svd(w); return u[:, :rank].
    # Full rank assumed (true for kaiming-uniform random weights).
    # TODO(synk): rank-deficient truncation edge case not reproduced.
    u, _, _ = jnp.linalg.svd(weight, full_matrices=False)
    return u


def make_params(key, in_channels, out_channels, kh, kw):
    k_w, k_b = jax.random.split(key)
    fan_in = in_channels * kh * kw
    bound = 1.0 / math.sqrt(fan_in)  # kaiming_uniform_ with a=sqrt(5)
    w = jax.random.uniform(k_w, (out_channels, in_channels, kh, kw),
                           minval=-bound, maxval=bound, dtype=jnp.float32)
    b = jax.random.uniform(k_b, (out_channels,),
                           minval=-bound, maxval=bound, dtype=jnp.float32)

    # Orthogonalization "enhancement" from __init__:
    flat = w.reshape(out_channels, in_channels * kh * kw)
    if flat.shape[0] >= flat.shape[1]:
        flat = _orth(flat)
    else:
        flat = _orth(flat.T).T
    w = flat.reshape(out_channels, in_channels, kh, kw)
    return w, b


if __name__ == "__main__":
    key = jax.random.PRNGKey(0)
    k_x, k_p = jax.random.split(key)

    # Module config: Conv2d_Enhancement(4, 8, kernel_size=3, stride=1, padding=1)
    N, Cin, H, W = 2, 4, 16, 16
    Cout, KH, KW = 8, 3, 3
    padding = (1, 1)

    x = jax.random.normal(k_x, (N, Cin, H, W), dtype=jnp.float32)
    weight, bias = make_params(k_p, Cin, Cout, KH, KW)

    out = conv2d_enhancement_forward(x, weight, bias, padding)
    out = jax.block_until_ready(out)

    # Reference check against XLA conv (same semantics as F.conv2d).
    ref = jax.lax.conv_general_dilated(
        x, weight, window_strides=(1, 1), padding=[padding, padding],
        dimension_numbers=("NCHW", "OIHW", "NCHW"))
    ref = ref + bias[None, :, None, None]
    assert out.shape == (N, Cout, H, W)
    assert jnp.allclose(out, ref, atol=1e-4, rtol=1e-4)

    print("KERNEL_OK")
</pallas_src>

<mosaic_0001>
module attributes {stable_mosaic.version = 11 : i64} {
  func.func @_conv2d_kernel(%arg0: i32, %arg1: memref<2x4x256xf32, #tpu.memory_space<vmem>>, %arg2: memref<8x72xf32, #tpu.memory_space<vmem>>, %arg3: memref<8x1xf32, #tpu.memory_space<vmem>>, %arg4: memref<2x8x256xf32, #tpu.memory_space<vmem>>, %arg5: memref<8x256xf32, #tpu.memory_space<vmem>>, %arg6: memref<72x512xf32, #tpu.memory_space<vmem>>) attributes {dimension_semantics = [#tpu.dimension_semantics<parallel>], iteration_bounds = array<i64: 1>, scalar_prefetch = 0 : i64, scratch_operands = 2 : i64, tpu.core_type = #tpu.core_type<tc>, window_params = [{transform_indices = @transform_0, window_bounds = array<i64: 2, 4, 256>}, {pipeline_mode = #tpu.pipeline_mode<synchronous>, transform_indices = @transform_1, window_bounds = array<i64: 8, 72>}, {pipeline_mode = #tpu.pipeline_mode<synchronous>, transform_indices = @transform_2, window_bounds = array<i64: 8, 1>}, {transform_indices = @transform_3, window_bounds = array<i64: 2, 8, 256>}]} {
    %0 = tpu.iota {dimensions = array<i32: 1>} : vector<1x256xi32>
    %c15_i32 = arith.constant 15 : i32
    %1 = vector.broadcast %c15_i32 : i32 to vector<1x256xi32>
    %2 = arith.andi %0, %1 : vector<1x256xi32>
    %cst = arith.constant 0.000000e+00 : f32
    %3 = vector.broadcast %cst : f32 to vector<8x256xf32>
    %c0 = arith.constant 0 : index
    %c0_0 = arith.constant 0 : index
    %4 = vector.load %arg5[%c0, %c0_0] : memref<8x256xf32, #tpu.memory_space<vmem>>, vector<8x256xf32>
    tpu.vector_store %arg5[%c0, %c0_0], %3 {strides = array<i32>} : memref<8x256xf32, #tpu.memory_space<vmem>>, vector<8x256xf32>,
    %c0_1 = arith.constant 0 : index
    %c0_2 = arith.constant 0 : index
    %c0_3 = arith.constant 0 : index
    %5 = vector.load %arg1[%c0_1, %c0_2, %c0_3] : memref<2x4x256xf32, #tpu.memory_space<vmem>>, vector<1x4x256xf32>
    %6 = vector.shape_cast %5 : vector<1x4x256xf32> to vector<4x256xf32>
    %c0_4 = arith.constant 0 : index
    %c0_5 = arith.constant 0 : index
    %7 = vector.load %arg5[%c0_4, %c0_5] : memref<8x256xf32, #tpu.memory_space<vmem>>, vector<4x256xf32>
    tpu.vector_store %arg5[%c0_4, %c0_5], %6 {strides = array<i32>} : memref<8x256xf32, #tpu.memory_space<vmem>>, vector<4x256xf32>,
    %c0_6 = arith.constant 0 : index
    %c0_7 = arith.constant 0 : index
    %8 = vector.load %arg5[%c0_6, %c0_7] : memref<8x256xf32, #tpu.memory_space<vmem>>, vector<8x256xf32>
    %c17_i32 = arith.constant 17 : i32
    %9 = tpu.dynamic_rotate %8 by %c17_i32 dim 1 : vector<8x256xf32>, i32 -> vector<8x256xf32>
    %c16_i32 = arith.constant 16 : i32
    %10 = vector.broadcast %c16_i32 : i32 to vector<1x256xi32>
    %11 = arith.cmpi sge, %0, %10 : vector<1x256xi32>
    %c1_i32 = arith.constant 1 : i32
    %12 = vector.broadcast %c1_i32 : i32 to vector<1x256xi32>
    %13 = arith.cmpi sge, %2, %12 : vector<1x256xi32>
    %14 = arith.andi %11, %13 : vector<1x256xi1>
    %cst_8 = arith.constant 0.000000e+00 : f32
    %15 = vector.broadcast %cst_8 : f32 to vector<8x256xf32>
    %16 = vector.shape_cast %14 : vector<1x256xi1> to vector<1x256xi1>
    %17 = vector.broadcast %16 : vector<1x256xi1> to vector<8x256xi1>
    %18 = arith.select %17, %9, %15 : vector<8x256xi1>, vector<8x256xf32>
    %c0_9 = arith.constant 0 : index
    %c0_10 = arith.constant 0 : index
    %19 = vector.load %arg6[%c0_9, %c0_10] : memref<72x512xf32, #tpu.memory_space<vmem>>, vector<8x256xf32>
    tpu.vector_store %arg6[%c0_9, %c0_10], %18 {strides = array<i32>} : memref<72x512xf32, #tpu.memory_space<vmem>>, vector<8x256xf32>,
    %c16_i32_11 = arith.constant 16 : i32
    %20 = tpu.dynamic_rotate %8 by %c16_i32_11 dim 1 : vector<8x256xf32>, i32 -> vector<8x256xf32>
    %c16_i32_12 = arith.constant 16 : i32
    %21 = vector.broadcast %c16_i32_12 : i32 to vector<1x256xi32>
    %22 = arith.cmpi sge, %0, %21 : vector<1x256xi32>
    %cst_13 = arith.constant 0.000000e+00 : f32
    %23 = vector.broadcast %cst_13 : f32 to vector<8x256xf32>
    %24 = vector.shape_cast %22 : vector<1x256xi1> to vector<1x256xi1>
    %25 = vector.broadcast %24 : vector<1x256xi1> to vector<8x256xi1>
    %26 = arith.select %25, %20, %23 : vector<8x256xi1>, vector<8x256xf32>
    %c8 = arith.constant 8 : index
    %c0_14 = arith.constant 0 : index
    %27 = vector.load %arg6[%c8, %c0_14] : memref<72x512xf32, #tpu.memory_space<vmem>>, vector<8x256xf32>
    tpu.vector_store %arg6[%c8, %c0_14], %26 {strides = array<i32>} : memref<72x512xf32, #tpu.memory_space<vmem>>, vector<8x256xf32>,
    %c15_i32_15 = arith.constant 15 : i32
    %28 = tpu.dynamic_rotate %8 by %c15_i32_15 dim 1 : vector<8x256xf32>, i32 -> vector<8x256xf32>
    %c16_i32_16 = arith.constant 16 : i32
    %29 = vector.broadcast %c16_i32_16 : i32 to vector<1x256xi32>
    %30 = arith.cmpi sge, %0, %29 : vector<1x256xi32>
    %c15_i32_17 = arith.constant 15 : i32
    %31 = vector.broadcast %c15_i32_17 : i32 to vector<1x256xi32>
    %32 = arith.cmpi slt, %2, %31 : vector<1x256xi32>
    %33 = arith.andi %30, %32 : vector<1x256xi1>
    %cst_18 = arith.constant 0.000000e+00 : f32
    %34 = vector.broadcast %cst_18 : f32 to vector<8x256xf32>
    %35 = vector.shape_cast %33 : vector<1x256xi1> to vector<1x256xi1>
    %36 = vector.broadcast %35 : vector<1x256xi1> to vector<8x256xi1>
    %37 = arith.select %36, %28, %34 : vector<8x256xi1>, vector<8x256xf32>
    %c16 = arith.constant 16 : index
    %c0_19 = arith.constant 0 : index
    %38 = vector.load %arg6[%c16, %c0_19] : memref<72x512xf32, #tpu.memory_space<vmem>>, vector<8x256xf32>
    tpu.vector_store %arg6[%c16, %c0_19], %37 {strides = array<i32>} : memref<72x512xf32, #tpu.memory_space<vmem>>, vector<8x256xf32>,
    %c1_i32_20 = arith.constant 1 : i32
    %39 = tpu.dynamic_rotate %8 by %c1_i32_20 dim 1 : vector<8x256xf32>, i32 -> vector<8x256xf32>
    %c1_i32_21 = arith.constant 1 : i32
    %40 = vector.broadcast %c1_i32_21 : i32 to vector<1x256xi32>
    %41 = arith.cmpi sge, %2, %40 : vector<1x256xi32>
    %cst_22 = arith.constant 0.000000e+00 : f32
    %42 = vector.broadcast %cst_22 : f32 to vector<8x256xf32>
    %43 = vector.shape_cast %41 : vector<1x256xi1> to vector<1x256xi1>
    %44 = vector.broadcast %43 : vector<1x256xi1> to vector<8x256xi1>
    %45 = arith.select %44, %39, %42 : vector<8x256xi1>, vector<8x256xf32>
    %c24 = arith.constant 24 : index
    %c0_23 = arith.constant 0 : index
    %46 = vector.load %arg6[%c24, %c0_23] : memref<72x512xf32, #tpu.memory_space<vmem>>, vector<8x256xf32>
    tpu.vector_store %arg6[%c24, %c0_23], %45 {strides = array<i32>} : memref<72x512xf32, #tpu.memory_space<vmem>>, vector<8x256xf32>,
    %c32 = arith.constant 32 : index
    %c0_24 = arith.constant 0 : index
    %47 = vector.load %arg6[%c32, %c0_24] : memref<72x512xf32, #tpu.memory_space<vmem>>, vector<8x256xf32>
    tpu.vector_store %arg6[%c32, %c0_24], %8 {strides = array<i32>} : memref<72x512xf32, #tpu.memory_space<vmem>>, vector<8x256xf32>,
    %c255_i32 = arith.constant 255 : i32
    %48 = tpu.dynamic_rotate %8 by %c255_i32 dim 1 : vector<8x256xf32>, i32 -> vector<8x256xf32>
    %c15_i32_25 = arith.constant 15 : i32
    %49 = vector.broadcast %c15_i32_25 : i32 to vector<1x256xi32>
    %50 = arith.cmpi slt, %2, %49 : vector<1x256xi32>
    %cst_26 = arith.constant 0.000000e+00 : f32
    %51 = vector.broadcast %cst_26 : f32 to vector<8x256xf32>
    %52 = vector.shape_cast %50 : vector<1x256xi1> to vector<1x256xi1>
    %53 = vector.broadcast %52 : vector<1x256xi1> to vector<8x256xi1>
    %54 = arith.select %53, %48, %51 : vector<8x256xi1>, vector<8x256xf32>
    %c40 = arith.constant 40 : index
    %c0_27 = arith.constant 0 : index
    %55 = vector.load %arg6[%c40, %c0_27] : memref<72x512xf32, #tpu.memory_space<vmem>>, vector<8x256xf32>
    tpu.vector_store %arg6[%c40, %c0_27], %54 {strides = array<i32>} : memref<72x512xf32, #tpu.memory_space<vmem>>, vector<8x256xf32>,
    %c241_i32 = arith.constant 241 : i32
    %56 = tpu.dynamic_rotate %8 by %c241_i32 dim 1 : vector<8x256xf32>, i32 -> vector<8x256xf32>
    %c240_i32 = arith.constant 240 : i32
    %57 = vector.broadcast %c240_i32 : i32 to vector<1x256xi32>
    %58 = arith.cmpi slt, %0, %57 : vector<1x256xi32>
    %c1_i32_28 = arith.constant 1 : i32
    %59 = vector.broadcast %c1_i32_28 : i32 to vector<1x256xi32>
    %60 = arith.cmpi sge, %2, %59 : vector<1x256xi32>
    %61 = arith.andi %58, %60 : vector<1x256xi1>
    %cst_29 = arith.constant 0.000000e+00 : f32
    %62 = vector.broadcast %cst_29 : f32 to vector<8x256xf32>
    %63 = vector.shape_cast %61 : vector<1x256xi1> to vector<1x256xi1>
    %64 = vector.broadcast %63 : vector<1x256xi1> to vector<8x256xi1>
    %65 = arith.select %64, %56, %62 : vector<8x256xi1>, vector<8x256xf32>
    %c48 = arith.constant 48 : index
    %c0_30 = arith.constant 0 : index
    %66 = vector.load %arg6[%c48, %c0_30] : memref<72x512xf32, #tpu.memory_space<vmem>>, vector<8x256xf32>
    tpu.vector_store %arg6[%c48, %c0_30], %65 {strides = array<i32>} : memref<72x512xf32, #tpu.memory_space<vmem>>, vector<8x256xf32>,
    %c240_i32_31 = arith.constant 240 : i32
    %67 = tpu.dynamic_rotate %8 by %c240_i32_31 dim 1 : vector<8x256xf32>, i32 -> vector<8x256xf32>
    %c240_i32_32 = arith.constant 240 : i32
    %68 = vector.broadcast %c240_i32_32 : i32 to vector<1x256xi32>
    %69 = arith.cmpi slt, %0, %68 : vector<1x256xi32>
    %cst_33 = arith.constant 0.000000e+00 : f32
    %70 = vector.broadcast %cst_33 : f32 to vector<8x256xf32>
    %71 = vector.shape_cast %69 : vector<1x256xi1> to vector<1x256xi1>
    %72 = vector.broadcast %71 : vector<1x256xi1> to vector<8x256xi1>
    %73 = arith.select %72, %67, %70 : vector<8x256xi1>, vector<8x256xf32>
    %c56 = arith.constant 56 : index
    %c0_34 = arith.constant 0 : index
    %74 = vector.load %arg6[%c56, %c0_34] : memref<72x512xf32, #tpu.memory_space<vmem>>, vector<8x256xf32>
    tpu.vector_store %arg6[%c56, %c0_34], %73 {strides = array<i32>} : memref<72x512xf32, #tpu.memory_space<vmem>>, vector<8x256xf32>,
    %c239_i32 = arith.constant 239 : i32
    %75 = tpu.dynamic_rotate %8 by %c239_i32 dim 1 : vector<8x256xf32>, i32 -> vector<8x256xf32>
    %c240_i32_35 = arith.constant 240 : i32
    %76 = vector.broadcast %c240_i32_35 : i32 to vector<1x256xi32>
    %77 = arith.cmpi slt, %0, %76 : vector<1x256xi32>
    %c15_i32_36 = arith.constant 15 : i32
    %78 = vector.broadcast %c15_i32_36 : i32 to vector<1x256xi32>
    %79 = arith.cmpi slt, %2, %78 : vector<1x256xi32>
    %80 = arith.andi %77, %79 : vector<1x256xi1>
    %cst_37 = arith.constant 0.000000e+00 : f32
    %81 = vector.broadcast %cst_37 : f32 to vector<8x256xf32>
    %82 = vector.shape_cast %80 : vector<1x256xi1> to vector<1x256xi1>
    %83 = vector.broadcast %82 : vector<1x256xi1> to vector<8x256xi1>
    %84 = arith.select %83, %75, %81 : vector<8x256xi1>, vector<8x256xf32>
    %c64 = arith.constant 64 : index
    %c0_38 = arith.constant 0 : index
    %85 = vector.load %arg6[%c64, %c0_38] : memref<72x512xf32, #tpu.memory_space<vmem>>, vector<8x256xf32>
    tpu.vector_store %arg6[%c64, %c0_38], %84 {strides = array<i32>} : memref<72x512xf32, #tpu.memory_space<vmem>>, vector<8x256xf32>,
    %c1 = arith.constant 1 : index
    %c0_39 = arith.constant 0 : index
    %c0_40 = arith.constant 0 : index
    %86 = vector.load %arg1[%c1, %c0_39, %c0_40] : memref<2x4x256xf32, #tpu.memory_space<vmem>>, vector<1x4x256xf32>
    %87 = vector.shape_cast %86 : vector<1x4x256xf32> to vector<4x256xf32>
    %c0_41 = arith.constant 0 : index
    %c0_42 = arith.constant 0 : index
    %88 = vector.load %arg5[%c0_41, %c0_42] : memref<8x256xf32, #tpu.memory_space<vmem>>, vector<4x256xf32>
    tpu.vector_store %arg5[%c0_41, %c0_42], %87 {strides = array<i32>} : memref<8x256xf32, #tpu.memory_space<vmem>>, vector<4x256xf32>,
    %c0_43 = arith.constant 0 : index
    %c0_44 = arith.constant 0 : index
    %89 = vector.load %arg5[%c0_43, %c0_44] : memref<8x256xf32, #tpu.memory_space<vmem>>, vector<8x256xf32>
    %c17_i32_45 = arith.constant 17 : i32
    %90 = tpu.dynamic_rotate %89 by %c17_i32_45 dim 1 : vector<8x256xf32>, i32 -> vector<8x256xf32>
    %c16_i32_46 = arith.constant 16 : i32
    %91 = vector.broadcast %c16_i32_46 : i32 to vector<1x256xi32>
    %92 = arith.cmpi sge, %0, %91 : vector<1x256xi32>
    %c1_i32_47 = arith.constant 1 : i32
    %93 = vector.broadcast %c1_i32_47 : i32 to vector<1x256xi32>
    %94 = arith.cmpi sge, %2, %93 : vector<1x256xi32>
    %95 = arith.andi %92, %94 : vector<1x256xi1>
    %cst_48 = arith.constant 0.000000e+00 : f32
    %96 = vector.broadcast %cst_48 : f32 to vector<8x256xf32>
    %97 = vector.shape_cast %95 : vector<1x256xi1> to vector<1x256xi1>
    %98 = vector.broadcast %97 : vector<1x256xi1> to vector<8x256xi1>
    %99 = arith.select %98, %90, %96 : vector<8x256xi1>, vector<8x256xf32>
    %c0_49 = arith.constant 0 : index
    %c256 = arith.constant 256 : index
    %100 = vector.load %arg6[%c0_49, %c256] : memref<72x512xf32, #tpu.memory_space<vmem>>, vector<8x256xf32>
    tpu.vector_store %arg6[%c0_49, %c256], %99 {strides = array<i32>} : memref<72x512xf32, #tpu.memory_space<vmem>>, vector<8x256xf32>,
    %c16_i32_50 = arith.constant 16 : i32
    %101 = tpu.dynamic_rotate %89 by %c16_i32_50 dim 1 : vector<8x256xf32>, i32 -> vector<8x256xf32>
    %c16_i32_51 = arith.constant 16 : i32
    %102 = vector.broadcast %c16_i32_51 : i32 to vector<1x256xi32>
    %103 = arith.cmpi sge, %0, %102 : vector<1x256xi32>
    %cst_52 = arith.constant 0.000000e+00 : f32
    %104 = vector.broadcast %cst_52 : f32 to vector<8x256xf32>
    %105 = vector.shape_cast %103 : vector<1x256xi1> to vector<1x256xi1>
    %106 = vector.broadcast %105 : vector<1x256xi1> to vector<8x256xi1>
    %107 = arith.select %106, %101, %104 : vector<8x256xi1>, vector<8x256xf32>
    %c8_53 = arith.constant 8 : index
    %c256_54 = arith.constant 256 : index
    %108 = vector.load %arg6[%c8_53, %c256_54] : memref<72x512xf32, #tpu.memory_space<vmem>>, vector<8x256xf32>
    tpu.vector_store %arg6[%c8_53, %c256_54], %107 {strides = array<i32>} : memref<72x512xf32, #tpu.memory_space<vmem>>, vector<8x256xf32>,
    %c15_i32_55 = arith.constant 15 : i32
    %109 = tpu.dynamic_rotate %89 by %c15_i32_55 dim 1 : vector<8x256xf32>, i32 -> vector<8x256xf32>
    %c16_i32_56 = arith.constant 16 : i32
    %110 = vector.broadcast %c16_i32_56 : i32 to vector<1x256xi32>
    %111 = arith.cmpi sge, %0, %110 : vector<1x256xi32>
    %c15_i32_57 = arith.constant 15 : i32
    %112 = vector.broadcast %c15_i32_57 : i32 to vector<1x256xi32>
    %113 = arith.cmpi slt, %2, %112 : vector<1x256xi32>
    %114 = arith.andi %111, %113 : vector<1x256xi1>
    %cst_58 = arith.constant 0.000000e+00 : f32
    %115 = vector.broadcast %cst_58 : f32 to vector<8x256xf32>
    %116 = vector.shape_cast %114 : vector<1x256xi1> to vector<1x256xi1>
    %117 = vector.broadcast %116 : vector<1x256xi1> to vector<8x256xi1>
    %118 = arith.select %117, %109, %115 : vector<8x256xi1>, vector<8x256xf32>
    %c16_59 = arith.constant 16 : index
    %c256_60 = arith.constant 256 : index
    %119 = vector.load %arg6[%c16_59, %c256_60] : memref<72x512xf32, #tpu.memory_space<vmem>>, vector<8x256xf32>
    tpu.vector_store %arg6[%c16_59, %c256_60], %118 {strides = array<i32>} : memref<72x512xf32, #tpu.memory_space<vmem>>, vector<8x256xf32>,
    %c1_i32_61 = arith.constant 1 : i32
    %120 = tpu.dynamic_rotate %89 by %c1_i32_61 dim 1 : vector<8x256xf32>, i32 -> vector<8x256xf32>
    %c1_i32_62 = arith.constant 1 : i32
    %121 = vector.broadcast %c1_i32_62 : i32 to vector<1x256xi32>
    %122 = arith.cmpi sge, %2, %121 : vector<1x256xi32>
    %cst_63 = arith.constant 0.000000e+00 : f32
    %123 = vector.broadcast %cst_63 : f32 to vector<8x256xf32>
    %124 = vector.shape_cast %122 : vector<1x256xi1> to vector<1x256xi1>
    %125 = vector.broadcast %124 : vector<1x256xi1> to vector<8x256xi1>
    %126 = arith.select %125, %120, %123 : vector<8x256xi1>, vector<8x256xf32>
    %c24_64 = arith.constant 24 : index
    %c256_65 = arith.constant 256 : index
    %127 = vector.load %arg6[%c24_64, %c256_65] : memref<72x512xf32, #tpu.memory_space<vmem>>, vector<8x256xf32>
    tpu.vector_store %arg6[%c24_64, %c256_65], %126 {strides = array<i32>} : memref<72x512xf32, #tpu.memory_space<vmem>>, vector<8x256xf32>,
    %c32_66 = arith.constant 32 : index
    %c256_67 = arith.constant 256 : index
    %128 = vector.load %arg6[%c32_66, %c256_67] : memref<72x512xf32, #tpu.memory_space<vmem>>, vector<8x256xf32>
    tpu.vector_store %arg6[%c32_66, %c256_67], %89 {strides = array<i32>} : memref<72x512xf32, #tpu.memory_space<vmem>>, vector<8x256xf32>,
    %c255_i32_68 = arith.constant 255 : i32
    %129 = tpu.dynamic_rotate %89 by %c255_i32_68 dim 1 : vector<8x256xf32>, i32 -> vector<8x256xf32>
    %c15_i32_69 = arith.constant 15 : i32
    %130 = vector.broadcast %c15_i32_69 : i32 to vector<1x256xi32>
    %131 = arith.cmpi slt, %2, %130 : vector<1x256xi32>
    %cst_70 = arith.constant 0.000000e+00 : f32
    %132 = vector.broadcast %cst_70 : f32 to vector<8x256xf32>
    %133 = vector.shape_cast %131 : vector<1x256xi1> to vector<1x256xi1>
    %134 = vector.broadcast %133 : vector<1x256xi1> to vector<8x256xi1>
    %135 = arith.select %134, %129, %132 : vector<8x256xi1>, vector<8x256xf32>
    %c40_71 = arith.constant 40 : index
    %c256_72 = arith.constant 256 : index
    %136 = vector.load %arg6[%c40_71, %c256_72] : memref<72x512xf32, #tpu.memory_space<vmem>>, vector<8x256xf32>
    tpu.vector_store %arg6[%c40_71, %c256_72], %135 {strides = array<i32>} : memref<72x512xf32, #tpu.memory_space<vmem>>, vector<8x256xf32>,
    %c241_i32_73 = arith.constant 241 : i32
    %137 = tpu.dynamic_rotate %89 by %c241_i32_73 dim 1 : vector<8x256xf32>, i32 -> vector<8x256xf32>
    %c240_i32_74 = arith.constant 240 : i32
    %138 = vector.broadcast %c240_i32_74 : i32 to vector<1x256xi32>
    %139 = arith.cmpi slt, %0, %138 : vector<1x256xi32>
    %c1_i32_75 = arith.constant 1 : i32
    %140 = vector.broadcast %c1_i32_75 : i32 to vector<1x256xi32>
    %141 = arith.cmpi sge, %2, %140 : vector<1x256xi32>
    %142 = arith.andi %139, %141 : vector<1x256xi1>
    %cst_76 = arith.constant 0.000000e+00 : f32
    %143 = vector.broadcast %cst_76 : f32 to vector<8x256xf32>
    %144 = vector.shape_cast %142 : vector<1x256xi1> to vector<1x256xi1>
    %145 = vector.broadcast %144 : vector<1x256xi1> to vector<8x256xi1>
    %146 = arith.select %145, %137, %143 : vector<8x256xi1>, vector<8x256xf32>
    %c48_77 = arith.constant 48 : index
    %c256_78 = arith.constant 256 : index
    %147 = vector.load %arg6[%c48_77, %c256_78] : memref<72x512xf32, #tpu.memory_space<vmem>>, vector<8x256xf32>
    tpu.vector_store %arg6[%c48_77, %c256_78], %146 {strides = array<i32>} : memref<72x512xf32, #tpu.memory_space<vmem>>, vector<8x256xf32>,
    %c240_i32_79 = arith.constant 240 : i32
    %148 = tpu.dynamic_rotate %89 by %c240_i32_79 dim 1 : vector<8x256xf32>, i32 -> vector<8x256xf32>
    %c240_i32_80 = arith.constant 240 : i32
    %149 = vector.broadcast %c240_i32_80 : i32 to vector<1x256xi32>
    %150 = arith.cmpi slt, %0, %149 : vector<1x256xi32>
    %cst_81 = arith.constant 0.000000e+00 : f32
    %151 = vector.broadcast %cst_81 : f32 to vector<8x256xf32>
    %152 = vector.shape_cast %150 : vector<1x256xi1> to vector<1x256xi1>
    %153 = vector.broadcast %152 : vector<1x256xi1> to vector<8x256xi1>
    %154 = arith.select %153, %148, %151 : vector<8x256xi1>, vector<8x256xf32>
    %c56_82 = arith.constant 56 : index
    %c256_83 = arith.constant 256 : index
    %155 = vector.load %arg6[%c56_82, %c256_83] : memref<72x512xf32, #tpu.memory_space<vmem>>, vector<8x256xf32>
    tpu.vector_store %arg6[%c56_82, %c256_83], %154 {strides = array<i32>} : memref<72x512xf32, #tpu.memory_space<vmem>>, vector<8x256xf32>,
    %c239_i32_84 = arith.constant 239 : i32
    %156 = tpu.dynamic_rotate %89 by %c239_i32_84 dim 1 : vector<8x256xf32>, i32 -> vector<8x256xf32>
    %c240_i32_85 = arith.constant 240 : i32
    %157 = vector.broadcast %c240_i32_85 : i32 to vector<1x256xi32>
    %158 = arith.cmpi slt, %0, %157 : vector<1x256xi32>
    %c15_i32_86 = arith.constant 15 : i32
    %159 = vector.broadcast %c15_i32_86 : i32 to vector<1x256xi32>
    %160 = arith.cmpi slt, %2, %159 : vector<1x256xi32>
    %161 = arith.andi %158, %160 : vector<1x256xi1>
    %cst_87 = arith.constant 0.000000e+00 : f32
    %162 = vector.broadcast %cst_87 : f32 to vector<8x256xf32>
    %163 = vector.shape_cast %161 : vector<1x256xi1> to vector<1x256xi1>
    %164 = vector.broadcast %163 : vector<1x256xi1> to vector<8x256xi1>
    %165 = arith.select %164, %156, %162 : vector<8x256xi1>, vector<8x256xf32>
    %c64_88 = arith.constant 64 : index
    %c256_89 = arith.constant 256 : index
    %166 = vector.load %arg6[%c64_88, %c256_89] : memref<72x512xf32, #tpu.memory_space<vmem>>, vector<8x256xf32>
    tpu.vector_store %arg6[%c64_88, %c256_89], %165 {strides = array<i32>} : memref<72x512xf32, #tpu.memory_space<vmem>>, vector<8x256xf32>,
    %c0_90 = arith.constant 0 : index
    %c0_91 = arith.constant 0 : index
    %167 = vector.load %arg2[%c0_90, %c0_91] : memref<8x72xf32, #tpu.memory_space<vmem>>, vector<8x72xf32>
    %c0_92 = arith.constant 0 : index
    %c0_93 = arith.constant 0 : index
    %168 = vector.load %arg6[%c0_92, %c0_93] : memref<72x512xf32, #tpu.memory_space<vmem>>, vector<72x512xf32>
    %cst_94 = arith.constant dense<0.000000e+00> : vector<8x512xf32>
    %169 = tpu.matmul %167, %168, %cst_94 {dimension_numbers = #tpu.dot_dimension_numbers<[1], [0], [0], [1], [0, 0, 1, 1], [], []>} : vector<8x72xf32>, vector<72x512xf32>, vector<8x512xf32> -> vector<8x512xf32>
    %c0_95 = arith.constant 0 : index
    %c0_96 = arith.constant 0 : index
    %170 = vector.load %arg3[%c0_95, %c0_96] : memref<8x1xf32, #tpu.memory_space<vmem>>, vector<8x1xf32>
    %171 = vector.broadcast %170 : vector<8x1xf32> to vector<8x512xf32>
    %172 = arith.addf %169, %171 : vector<8x512xf32>
    %173 = vector.extract_strided_slice %172 {offsets = [0, 0], sizes = [8, 256], strides = [1, 1]} : vector<8x512xf32> to vector<8x256xf32>
    %c0_97 = arith.constant 0 : index
    %c0_98 = arith.constant 0 : index
    %c0_99 = arith.constant 0 : index
    %174 = vector.load %arg4[%c0_97, %c0_98, %c0_99] : memref<2x8x256xf32, #tpu.memory_space<vmem>>, vector<1x8x256xf32>
    %175 = vector.shape_cast %174 : vector<1x8x256xf32> to vector<8x256xf32>
    %176 = vector.shape_cast %173 : vector<8x256xf32> to vector<1x8x256xf32>
    tpu.vector_store %arg4[%c0_97, %c0_98, %c0_99], %176 {strides = array<i32>} : memref<2x8x256xf32, #tpu.memory_space<vmem>>, vector<1x8x256xf32>,
    %177 = vector.extract_strided_slice %172 {offsets = [0, 256], sizes = [8, 256], strides = [1, 1]} : vector<8x512xf32> to vector<8x256xf32>
    %c1_100 = arith.constant 1 : index
    %c0_101 = arith.constant 0 : index
    %c0_102 = arith.constant 0 : index
    %178 = vector.load %arg4[%c1_100, %c0_101, %c0_102] : memref<2x8x256xf32, #tpu.memory_space<vmem>>, vector<1x8x256xf32>
    %179 = vector.shape_cast %178 : vector<1x8x256xf32> to vector<8x256xf32>
    %180 = vector.shape_cast %177 : vector<8x256xf32> to vector<1x8x256xf32>
    tpu.vector_store %arg4[%c1_100, %c0_101, %c0_102], %180 {strides = array<i32>} : memref<2x8x256xf32, #tpu.memory_space<vmem>>, vector<1x8x256xf32>,
    return
  }
  func.func @transform_0(%arg0: i32) -> (i32, i32, i32) {
    %c0_i32 = arith.constant 0 : i32
    %c0_i32_0 = arith.constant 0 : i32
    %c0_i32_1 = arith.constant 0 : i32
    return %arg0, %c0_i32, %c0_i32_0 : i32, i32, i32
  }
  func.func @transform_1(%arg0: i32) -> (i32, i32) {
    %c0_i32 = arith.constant 0 : i32
    %c0_i32_0 = arith.constant 0 : i32
    %c0_i32_1 = arith.constant 0 : i32
    return %c0_i32, %c0_i32_0 : i32, i32
  }
  func.func @transform_2(%arg0: i32) -> (i32, i32) {
    %c0_i32 = arith.constant 0 : i32
    %c0_i32_0 = arith.constant 0 : i32
    %c0_i32_1 = arith.constant 0 : i32
    return %c0_i32, %c0_i32_0 : i32, i32
  }
  func.func @transform_3(%arg0: i32) -> (i32, i32, i32) {
    %c0_i32 = arith.constant 0 : i32
    %c0_i32_0 = arith.constant 0 : i32
    %c0_i32_1 = arith.constant 0 : i32
    return %arg0, %c0_i32, %c0_i32_0 : i32, i32, i32
  }
}

</mosaic_0001>

<llo_original>
// kernel: tpu_custom_call.1
$region0: #{tpu_custom_call.1}
  #allocation0 [shape = 'u32[]', space=smem, size = 0x4, offset = 0x4, fixed_abs, tag = 'smem constant byte address 0x4 - core index']
  #allocation1 [shape = 'u32[144,128]{1,0:T(1,128)}', space=vmem, size = 0x12000, scoped, tag = 'internal scratch']
  #allocation2 [shape = 'f32[8,256]{1,0:T(8,128)}', space=vmem, size = 0x2000, scoped, tag = 'scratch operand']
  #allocation3 [shape = 'f32[72,512]{1,0:T(8,128)}', space=vmem, size = 0x24000, scoped, tag = 'scratch operand']
  %s0 = inlined_call_operand.hbm [shape: f32[2,4,256], index: 0, kind: input, shape index: {}]
  %s1 = inlined_call_operand.vmem [shape: f32[8,72], index: 1, kind: input, shape index: {}]
  %s2 = inlined_call_operand.vmem [shape: f32[8,1], index: 2, kind: input, shape index: {}]
  %s3 = inlined_call_operand.hbm [shape: f32[2,8,256], index: 3, kind: output, shape index: {}]
  %s4 = sld [smem:[#allocation0]]
  $region26: #{tpu_custom_call.1} parent=0
    _
  %s6 = ssub.s32 1, %s4
  %s7 = scalar_select 0, %s6, %s4
  $region1: #{tpu_custom_call.1} parent=0
    #allocation4 [shape = 'u8[8192]{0}', space=vmem, size = 0x2000, scoped, tag = 'input window, operand 0, single buffered']
    #allocation5 [shape = 's32[1]{0}', space=sflag, size = 0x4, scoped, tag = 'scoped memory for tpu_custom_call.1']
    #allocation6 [shape = 's32[1]{0}', space=sflag, size = 0x4, scoped, tag = 'scoped memory for tpu_custom_call.1']
    #allocation7 [shape = 'u8[16384]{0}', space=vmem, size = 0x4000, scoped, tag = 'output window, operand 0, single buffered']
    %8 = vsyncpa [#allocation5], 0
    %9 = vsyncpa [#allocation6], 0
    // Predicated region
    $region2: #{tpu_custom_call.1} parent=1 // pred_check
      _
    $region3: #{tpu_custom_call.1} parent=1 // pred_check_branch
      %11 = sbr.rel (0) target = $region5
    $region4: #{tpu_custom_call.1} parent=1 // pred_region
      %s13 = ssub.s32 256, 256
      %14 = vsyncadd [#allocation5], %s13
      %s15 = sshll.u32 [#allocation4], 4
      %s16 = int_to_ptr.vmem [resolvable:$true] %s15
      %21 = dma.hbm_to_vmem [thread:$0]  %s0, 256, %s16, [#allocation5], 128, 128, 8
    $region5: #{tpu_custom_call.1} parent=1 // pred_fallthru
      _
    // Predicated region
    $region6: #{tpu_custom_call.1} parent=1 // pred_check
      _
    $region7: #{tpu_custom_call.1} parent=1 // pred_check_branch
      %23 = sbr.rel (0) target = $region9
    $region8: #{tpu_custom_call.1} parent=1 // pred_region
      _
    $region9: #{tpu_custom_call.1} parent=1 // pred_fallthru
      _
    // Predicated region
    $region10: #{tpu_custom_call.1} parent=1 // pred_check
      _
    $region11: #{tpu_custom_call.1} parent=1 // pred_check_branch
      %25 = sbr.rel (0) target = $region13
    $region12: #{tpu_custom_call.1} parent=1 // pred_region
      _
    $region13: #{tpu_custom_call.1} parent=1 // pred_fallthru
      _
    // Predicated region
    $region14: #{tpu_custom_call.1} parent=1 // pred_check
      _
    $region15: #{tpu_custom_call.1} parent=1 // pred_check_branch
      %27 = sbr.rel (0) target = $region17
    $region16: #{tpu_custom_call.1} parent=1 // pred_region
      %28 = dma.done [#allocation5], 256
    $region17: #{tpu_custom_call.1} parent=1 // pred_fallthru
      _
    %v29 = vlaneseq
    %v30 = vand.u32 %v29, 127
    %v31 = vadd.s32 %v30, 128
    %v32 = vand.u32 %v30, 15
    %v33 = vand.u32 %v31, 15
    %34 = vst [vmem:[#allocation2] sm:$0xff] 0.0
    %35 = vst [vmem:[#allocation2 + $0x8] sm:$0xff] 0.0
    %v36 = vld [vmem:[#allocation4] sm:$0xff]
    %v38 = vcombine.high %v36, %v36
    %40 = vst [vmem:[#allocation2] sm:$0xf] %v36
    %41 = vst [vmem:[#allocation2 + $0x8] sm:$0xf] %v38
    %v42 = vld [vmem:[#allocation2] sm:$0xff]
    %v43 = vld [vmem:[#allocation2 + $0x8] sm:$0xff]
    %44 = vrot.lane.b32.xlu0 %v42, 17
    %v45 = vpop.permute.xlu0 %44
    %46 = vrot.lane.b32.xlu0 %v43, 17
    %v47 = vpop.permute.xlu0 %46
    %vm48 = vcmp.lt.s32.totalorder %v30, 17
    %v49 = vsel %vm48, %v45, %v47
    %v50 = vsel %vm48, %v47, %v45
    %vm51 = vcmp.ge.s32.totalorder %v30, 16
    %vm52 = vcmp.ge.s32.totalorder %v31, 16
    %vm53 = vcmp.ge.s32.totalorder %v32, 1
    %vm54 = vcmp.ge.s32.totalorder %v33, 1
    %vm55 = vmand %vm51, %vm53
    %vm56 = vmand %vm52, %vm54
    %v57 = vsel %vm55, 1, 0
    %v58 = vsel %vm56, 1, 0
    %vm59 = vcmp.eq.s32.totalorder %v57, 1
    %vm60 = vcmp.eq.s32.totalorder %v58, 1
    %v61 = vsel %vm59, %v50, 0.0
    %v62 = vsel %vm60, %v49, 0.0
    %63 = vst [vmem:[#allocation3] sm:$0xff] %v61
    %64 = vst [vmem:[#allocation3 + $0x8] sm:$0xff] %v62
    %65 = vrot.lane.b32.xlu0 %v42, 16
    %v66 = vpop.permute.xlu0 %65
    %67 = vrot.lane.b32.xlu0 %v43, 16
    %v68 = vpop.permute.xlu0 %67
    %vm69 = vcmp.lt.s32.totalorder %v30, 16
    %v70 = vsel %vm69, %v66, %v68
    %v71 = vsel %vm69, %v68, %v66
    %v72 = vsel %vm51, 1, 0
    %v73 = vsel %vm52, 1, 0
    %vm74 = vcmp.eq.s32.totalorder %v72, 1
    %vm75 = vcmp.eq.s32.totalorder %v73, 1
    %v76 = vsel %vm74, %v71, 0.0
    %v77 = vsel %vm75, %v70, 0.0
    %78 = vst [vmem:[#allocation3 + $0x20] sm:$0xff] %v76
    %79 = vst [vmem:[#allocation3 + $0x28] sm:$0xff] %v77
    %80 = vrot.lane.b32.xlu0 %v42, 15
    %v81 = vpop.permute.xlu0 %80
    %82 = vrot.lane.b32.xlu0 %v43, 15
    %v83 = vpop.permute.xlu0 %82
    %vm84 = vcmp.lt.s32.totalorder %v30, 15
    %v85 = vsel %vm84, %v81, %v83
    %v86 = vsel %vm84, %v83, %v81
    %vm87 = vcmp.lt.s32.totalorder %v32, 15
    %vm88 = vcmp.lt.s32.totalorder %v33, 15
    %vm89 = vmand %vm51, %vm87
    %vm90 = vmand %vm52, %vm88
    %v91 = vsel %vm89, 1, 0
    %v92 = vsel %vm90, 1, 0
    %vm93 = vcmp.eq.s32.totalorder %v91, 1
    %vm94 = vcmp.eq.s32.totalorder %v92, 1
    %v95 = vsel %vm93, %v86, 0.0
    %v96 = vsel %vm94, %v85, 0.0
    %97 = vst [vmem:[#allocation3 + $0x40] sm:$0xff] %v95
    %98 = vst [vmem:[#allocation3 + $0x48] sm:$0xff] %v96
    %99 = vrot.lane.b32.xlu0 %v42, 1
    %v100 = vpop.permute.xlu0 %99
    %101 = vrot.lane.b32.xlu0 %v43, 1
    %v102 = vpop.permute.xlu0 %101
    %vm103 = vcmp.lt.s32.totalorder %v30, 1
    %v104 = vsel %vm103, %v100, %v102
    %v105 = vsel %vm103, %v102, %v100
    %v106 = vsel %vm53, 1, 0
    %v107 = vsel %vm54, 1, 0
    %vm108 = vcmp.eq.s32.totalorder %v106, 1
    %vm109 = vcmp.eq.s32.totalorder %v107, 1
    %v110 = vsel %vm108, %v105, 0.0
    %v111 = vsel %vm109, %v104, 0.0
    %112 = vst [vmem:[#allocation3 + $0x60] sm:$0xff] %v110
    %113 = vst [vmem:[#allocation3 + $0x68] sm:$0xff] %v111
    %114 = vst [vmem:[#allocation3 + $0x80] sm:$0xff] %v42
    %115 = vst [vmem:[#allocation3 + $0x88] sm:$0xff] %v43
    %116 = vrot.lane.b32.xlu0 %v42, 127
    %v117 = vpop.permute.xlu0 %116
    %118 = vrot.lane.b32.xlu0 %v43, 127
    %v119 = vpop.permute.xlu0 %118
    %vm120 = vcmp.lt.s32.totalorder %v30, 127
    %v121 = vsel %vm120, %v117, %v119
    %v122 = vsel %vm120, %v119, %v117
    %v123 = vsel %vm87, 1, 0
    %v124 = vsel %vm88, 1, 0
    %vm125 = vcmp.eq.s32.totalorder %v123, 1
    %vm126 = vcmp.eq.s32.totalorder %v124, 1
    %v127 = vsel %vm125, %v121, 0.0
    %v128 = vsel %vm126, %v122, 0.0
    %129 = vst [vmem:[#allocation3 + $0xa0] sm:$0xff] %v127
    %130 = vst [vmem:[#allocation3 + $0xa8] sm:$0xff] %v128
    %131 = vrot.lane.b32.xlu0 %v42, 113
    %v132 = vpop.permute.xlu0 %131
    %133 = vrot.lane.b32.xlu0 %v43, 113
    %v134 = vpop.permute.xlu0 %133
    %vm135 = vcmp.lt.s32.totalorder %v30, 113
    %v136 = vsel %vm135, %v132, %v134
    %v137 = vsel %vm135, %v134, %v132
    %vm138 = vcmp.lt.s32.totalorder %v30, 240
    %vm139 = vcmp.lt.s32.totalorder %v31, 240
    %vm140 = vmand %vm138, %vm53
    %vm141 = vmand %vm139, %vm54
    %v142 = vsel %vm140, 1, 0
    %v143 = vsel %vm141, 1, 0
    %vm144 = vcmp.eq.s32.totalorder %v142, 1
    %vm145 = vcmp.eq.s32.totalorder %v143, 1
    %v146 = vsel %vm144, %v136, 0.0
    %v147 = vsel %vm145, %v137, 0.0
    %148 = vst [vmem:[#allocation3 + $0xc0] sm:$0xff] %v146
    %149 = vst [vmem:[#allocation3 + $0xc8] sm:$0xff] %v147
    %150 = vrot.lane.b32.xlu0 %v42, 112
    %v151 = vpop.permute.xlu0 %150
    %152 = vrot.lane.b32.xlu0 %v43, 112
    %v153 = vpop.permute.xlu0 %152
    %vm154 = vcmp.lt.s32.totalorder %v30, 112
    %v155 = vsel %vm154, %v151, %v153
    %v156 = vsel %vm154, %v153, %v151
    %v157 = vsel %vm138, 1, 0
    %v158 = vsel %vm139, 1, 0
    %vm159 = vcmp.eq.s32.totalorder %v157, 1
    %vm160 = vcmp.eq.s32.totalorder %v158, 1
    %v161 = vsel %vm159, %v155, 0.0
    %v162 = vsel %vm160, %v156, 0.0
    %163 = vst [vmem:[#allocation3 + $0xe0] sm:$0xff] %v161
    %164 = vst [vmem:[#allocation3 + $0xe8] sm:$0xff] %v162
    %165 = vrot.lane.b32.xlu0 %v42, 111
    %v166 = vpop.permute.xlu0 %165
    %167 = vrot.lane.b32.xlu0 %v43, 111
    %v168 = vpop.permute.xlu0 %167
    %vm169 = vcmp.lt.s32.totalorder %v30, 111
    %v170 = vsel %vm169, %v166, %v168
    %v171 = vsel %vm169, %v168, %v166
    %vm172 = vmand %vm138, %vm87
    %vm173 = vmand %vm139, %vm88
    %v174 = vsel %vm172, 1, 0
    %v175 = vsel %vm173, 1, 0
    %vm176 = vcmp.eq.s32.totalorder %v174, 1
    %vm177 = vcmp.eq.s32.totalorder %v175, 1
    %v178 = vsel %vm176, %v170, 0.0
    %v179 = vsel %vm177, %v171, 0.0
    %180 = vst [vmem:[#allocation3 + $0x100] sm:$0xff] %v178
    %181 = vst [vmem:[#allocation3 + $0x108] sm:$0xff] %v179
    %s182 = scalar_lea.vmem [#allocation4], 8
    %v183 = vld [vmem:[%s182] sm:$0xff]
    %v185 = vcombine.high %v183, %v183
    %187 = vst [vmem:[#allocation2] sm:$0xf] %v183
    %188 = vst [vmem:[#allocation2 + $0x8] sm:$0xf] %v185
    %v189 = vld [vmem:[#allocation2] sm:$0xff]
    %v190 = vld [vmem:[#allocation2 + $0x8] sm:$0xff]
    %191 = vrot.lane.b32.xlu0 %v189, 17
    %v192 = vpop.permute.xlu0 %191
    %193 = vrot.lane.b32.xlu0 %v190, 17
    %v194 = vpop.permute.xlu0 %193
    %v195 = vsel %vm48, %v192, %v194
    %v196 = vsel %vm48, %v194, %v192
    %v197 = vsel %vm59, %v196, 0.0
    %v198 = vsel %vm60, %v195, 0.0
    %199 = vst [vmem:[#allocation3 + $0x10] sm:$0xff] %v197
    %200 = vst [vmem:[#allocation3 + $0x18] sm:$0xff] %v198
    %201 = vrot.lane.b32.xlu0 %v189, 16
    %v202 = vpop.permute.xlu0 %201
    %203 = vrot.lane.b32.xlu0 %v190, 16
    %v204 = vpop.permute.xlu0 %203
    %v205 = vsel %vm69, %v202, %v204
    %v206 = vsel %vm69, %v204, %v202
    %v207 = vsel %vm74, %v206, 0.0
    %v208 = vsel %vm75, %v205, 0.0
    %209 = vst [vmem:[#allocation3 + $0x30] sm:$0xff] %v207
    %210 = vst [vmem:[#allocation3 + $0x38] sm:$0xff] %v208
    %211 = vrot.lane.b32.xlu0 %v189, 15
    %v212 = vpop.permute.xlu0 %211
    %213 = vrot.lane.b32.xlu0 %v190, 15
    %v214 = vpop.permute.xlu0 %213
    %v215 = vsel %vm84, %v212, %v214
    %v216 = vsel %vm84, %v214, %v212
    %v217 = vsel %vm93, %v216, 0.0
    %v218 = vsel %vm94, %v215, 0.0
    %219 = vst [vmem:[#allocation3 + $0x50] sm:$0xff] %v217
    %220 = vst [vmem:[#allocation3 + $0x58] sm:$0xff] %v218
    %221 = vrot.lane.b32.xlu0 %v189, 1
    %v222 = vpop.permute.xlu0 %221
    %223 = vrot.lane.b32.xlu0 %v190, 1
    %v224 = vpop.permute.xlu0 %223
    %v225 = vsel %vm103, %v222, %v224
    %v226 = vsel %vm103, %v224, %v222
    %v227 = vsel %vm108, %v226, 0.0
    %v228 = vsel %vm109, %v225, 0.0
    %229 = vst [vmem:[#allocation3 + $0x70] sm:$0xff] %v227
    %230 = vst [vmem:[#allocation3 + $0x78] sm:$0xff] %v228
    %231 = vst [vmem:[#allocation3 + $0x90] sm:$0xff] %v189
    %232 = vst [vmem:[#allocation3 + $0x98] sm:$0xff] %v190
    %233 = vrot.lane.b32.xlu0 %v189, 127
    %v234 = vpop.permute.xlu0 %233
    %235 = vrot.lane.b32.xlu0 %v190, 127
    %v236 = vpop.permute.xlu0 %235
    %v237 = vsel %vm120, %v234, %v236
    %v238 = vsel %vm120, %v236, %v234
    %v239 = vsel %vm125, %v237, 0.0
    %v240 = vsel %vm126, %v238, 0.0
    %241 = vst [vmem:[#allocation3 + $0xb0] sm:$0xff] %v239
    %242 = vst [vmem:[#allocation3 + $0xb8] sm:$0xff] %v240
    %243 = vrot.lane.b32.xlu0 %v189, 113
    %v244 = vpop.permute.xlu0 %243
    %245 = vrot.lane.b32.xlu0 %v190, 113
    %v246 = vpop.permute.xlu0 %245
    %v247 = vsel %vm135, %v244, %v246
    %v248 = vsel %vm135, %v246, %v244
    %v249 = vsel %vm144, %v247, 0.0
    %v250 = vsel %vm145, %v248, 0.0
    %251 = vst [vmem:[#allocation3 + $0xd0] sm:$0xff] %v249
    %252 = vst [vmem:[#allocation3 + $0xd8] sm:$0xff] %v250
    %253 = vrot.lane.b32.xlu0 %v189, 112
    %v254 = vpop.permute.xlu0 %253
    %255 = vrot.lane.b32.xlu0 %v190, 112
    %v256 = vpop.permute.xlu0 %255
    %v257 = vsel %vm154, %v254, %v256
    %v258 = vsel %vm154, %v256, %v254
    %v259 = vsel %vm159, %v257, 0.0
    %v260 = vsel %vm160, %v258, 0.0
    %261 = vst [vmem:[#allocation3 + $0xf0] sm:$0xff] %v259
    %262 = vst [vmem:[#allocation3 + $0xf8] sm:$0xff] %v260
    %263 = vrot.lane.b32.xlu0 %v189, 111
    %v264 = vpop.permute.xlu0 %263
    %265 = vrot.lane.b32.xlu0 %v190, 111
    %v266 = vpop.permute.xlu0 %265
    %v267 = vsel %vm169, %v264, %v266
    %v268 = vsel %vm169, %v266, %v264
    %v269 = vsel %vm176, %v267, 0.0
    %v270 = vsel %vm177, %v268, 0.0
    %271 = vst [vmem:[#allocation3 + $0x110] sm:$0xff] %v269
    %272 = vst [vmem:[#allocation3 + $0x118] sm:$0xff] %v270
    %v273 = vld [vmem:[%s1] sm:$0xff]
    %v274 = vld [vmem:[#allocation3] sm:$0xff]
    %v275 = vld [vmem:[#allocation3 + $0x8] sm:$0xff]
    %v276 = vld [vmem:[#allocation3 + $0x10] sm:$0xff]
    %v277 = vld [vmem:[#allocation3 + $0x18] sm:$0xff]
    %v278 = vld [vmem:[#allocation3 + $0x20] sm:$0xff]
    %v279 = vld [vmem:[#allocation3 + $0x28] sm:$0xff]
    %v280 = vld [vmem:[#allocation3 + $0x30] sm:$0xff]
    %v281 = vld [vmem:[#allocation3 + $0x38] sm:$0xff]
    %v282 = vld [vmem:[#allocation3 + $0x40] sm:$0xff]
    %v283 = vld [vmem:[#allocation3 + $0x48] sm:$0xff]
    %v284 = vld [vmem:[#allocation3 + $0x50] sm:$0xff]
    %v285 = vld [vmem:[#allocation3 + $0x58] sm:$0xff]
    %v286 = vld [vmem:[#allocation3 + $0x60] sm:$0xff]
    %v287 = vld [vmem:[#allocation3 + $0x68] sm:$0xff]
    %v288 = vld [vmem:[#allocation3 + $0x70] sm:$0xff]
    %v289 = vld [vmem:[#allocation3 + $0x78] sm:$0xff]
    %v290 = vld [vmem:[#allocation3 + $0x80] sm:$0xff]
    %v291 = vld [vmem:[#allocation3 + $0x88] sm:$0xff]
    %v292 = vld [vmem:[#allocation3 + $0x90] sm:$0xff]
    %v293 = vld [vmem:[#allocation3 + $0x98] sm:$0xff]
    %v294 = vld [vmem:[#allocation3 + $0xa0] sm:$0xff]
    %v295 = vld [vmem:[#allocation3 + $0xa8] sm:$0xff]
    %v296 = vld [vmem:[#allocation3 + $0xb0] sm:$0xff]
    %v297 = vld [vmem:[#allocation3 + $0xb8] sm:$0xff]
    %v298 = vld [vmem:[#allocation3 + $0xc0] sm:$0xff]
    %v299 = vld [vmem:[#allocation3 + $0xc8] sm:$0xff]
    %v300 = vld [vmem:[#allocation3 + $0xd0] sm:$0xff]
    %v301 = vld [vmem:[#allocation3 + $0xd8] sm:$0xff]
    %v302 = vld [vmem:[#allocation3 + $0xe0] sm:$0xff]
    %v303 = vld [vmem:[#allocation3 + $0xe8] sm:$0xff]
    %v304 = vld [vmem:[#allocation3 + $0xf0] sm:$0xff]
    %v305 = vld [vmem:[#allocation3 + $0xf8] sm:$0xff]
    %v306 = vld [vmem:[#allocation3 + $0x100] sm:$0xff]
    %v307 = vld [vmem:[#allocation3 + $0x108] sm:$0xff]
    %v308 = vld [vmem:[#allocation3 + $0x110] sm:$0xff]
    %v309 = vld [vmem:[#allocation3 + $0x118] sm:$0xff]
    %v310 = vld [vmem:[%s2] sm:$0xff]
    %312 = vset.pattern.permute.xlu0 0
    %313 = vperm.xlu0 %312, %v310
    %v314 = vpop.permute.xlu0 %313
    %vm316 = vcmask 588800
    %v318 = vsel %vm316, %v273, 0
    %320 = vmatprep.subr.mxu0 %v275
    %321 = vmatpush1.msra.mxu0 %v274
    %322 = vmatprep.subr.mxu0 %v279
    %323 = vmatpush1.msra.mxu0 %v278
    %324 = vmatprep.subr.mxu0 %v283
    %325 = vmatpush1.msra.mxu0 %v282
    %326 = vmatprep.subr.mxu0 %v287
    %327 = vmatpush1.msra.mxu0 %v286
    %328 = vmatprep.subr.mxu0 %v291
    %329 = vmatpush1.msra.mxu0 %v290
    %330 = vmatprep.subr.mxu0 %v295
    %331 = vmatpush1.msra.mxu0 %v294
    %332 = vmatprep.subr.mxu0 %v299
    %333 = vmatpush1.msra.mxu0 %v298
    %334 = vmatprep.subr.mxu0 %v303
    %335 = vmatpush1.msra.mxu0 %v302
    %336 = vmatprep.subr.mxu0 %v307
    %337 = vmatpush1.msra.mxu0 %v306
    %338 = vmatprep.subr.mxu0 0.0
    %339 = vmatpush1.msra.mxu0 0.0
    %340 = vmatprep.subr.mxu0 0.0
    %341 = vmatpush1.msra.mxu0 0.0
    %342 = vmatprep.subr.mxu0 0.0
    %343 = vmatpush1.msra.mxu0 0.0
    %344 = vmatprep.subr.mxu0 0.0
    %345 = vmatpush1.msra.mxu0 0.0
    %346 = vmatprep.subr.mxu0 0.0
    %347 = vmatpush1.msra.mxu0 0.0
    %348 = vmatprep.subr.mxu0 0.0
    %349 = vmatpush1.msra.mxu0 0.0
    %350 = vmatprep.subr.mxu0 0.0
    %351 = vmatpush1.msra.mxu0 0.0
    %352 = vmatprep.subr.mxu0 0.0
    %353 = vmatpush1.msra.mxu0 0.0
    %354 = vmatprep.subr.mxu0 0.0
    %355 = vmatpush1.msra.mxu0 0.0
    %356 = vmatprep.subr.mxu0 0.0
    %357 = vmatpush1.msra.mxu0 0.0
    %358 = vmatprep.subr.mxu0 0.0
    %359 = vmatpush1.msra.mxu0 0.0
    %360 = vmatprep.subr.mxu0 0.0
    %361 = vmatpush1.msra.mxu0 0.0
    %362 = vmatprep.subr.mxu0 0.0
    %363 = vmatpush1.msra.mxu0 0.0
    %364 = vmatprep.subr.mxu0 0.0
    %365 = vmatpush1.msra.mxu0 0.0
    %366 = vmatprep.subr.mxu0 0.0
    %367 = vmatpush1.msra.mxu0 0.0
    %368 = vmatprep.subr.mxu0 0.0
    %369 = vmatpush1.msra.mxu0 0.0
    %370 = vmatprep.subr.mxu0 0.0
    %371 = vmatpush1.msra.mxu0 0.0
    %372 = vmatprep.subr.mxu0 0.0
    %373 = vmatpush1.msra.mxu0 0.0
    %374 = vmatprep.subr.mxu0 0.0
    %375 = vmatpush1.msra.mxu0 0.0
    %376 = vmatprep.subr.mxu0 0.0
    %377 = vmatpush1.msra.mxu0 0.0
    %378 = vmatprep.subr.mxu0 0.0
    %379 = vmatpush1.msra.mxu0 0.0
    %380 = vmatprep.subr.mxu0 0.0
    %381 = vmatpush1.msra.mxu0 0.0
    %382 = vmatprep.subr.mxu0 0.0
    %383 = vmatpush1.msra.mxu0 0.0
    %384 = vmatprep.mubr.f32.mxu0 0.0
    %385 = vmatmul.mubr.f32.gmra.mrb[0].mxu0 %v318
    %v386 = vpop.f32.mrb[0].mxu0
    %v387 = vadd.f32 %v314, %v386
    %v388 = vpop.f32.mrb[0].mxu0
    %v389 = vadd.f32 %v314, %v388
    %390 = vdwg.mxu0
    %391 = vmatprep.subr.mxu0 %v277
    %392 = vmatpush1.msra.mxu0 %v276
    %393 = vmatprep.subr.mxu0 %v281
    %394 = vmatpush1.msra.mxu0 %v280
    %395 = vmatprep.subr.mxu0 %v285
    %396 = vmatpush1.msra.mxu0 %v284
    %397 = vmatprep.subr.mxu0 %v289
    %398 = vmatpush1.msra.mxu0 %v288
    %399 = vmatprep.subr.mxu0 %v293
    %400 = vmatpush1.msra.mxu0 %v292
    %401 = vmatprep.subr.mxu0 %v297
    %402 = vmatpush1.msra.mxu0 %v296
    %403 = vmatprep.subr.mxu0 %v301
    %404 = vmatpush1.msra.mxu0 %v300
    %405 = vmatprep.subr.mxu0 %v305
    %406 = vmatpush1.msra.mxu0 %v304
    %407 = vmatprep.subr.mxu0 %v309
    %408 = vmatpush1.msra.mxu0 %v308
    %409 = vmatprep.subr.mxu0 0.0
    %410 = vmatpush1.msra.mxu0 0.0
    %411 = vmatprep.subr.mxu0 0.0
    %412 = vmatpush1.msra.mxu0 0.0
    %413 = vmatprep.subr.mxu0 0.0
    %414 = vmatpush1.msra.mxu0 0.0
    %415 = vmatprep.subr.mxu0 0.0
    %416 = vmatpush1.msra.mxu0 0.0
    %417 = vmatprep.subr.mxu0 0.0
    %418 = vmatpush1.msra.mxu0 0.0
    %419 = vmatprep.subr.mxu0 0.0
    %420 = vmatpush1.msra.mxu0 0.0
    %421 = vmatprep.subr.mxu0 0.0
    %422 = vmatpush1.msra.mxu0 0.0
    %423 = vmatprep.subr.mxu0 0.0
    %424 = vmatpush1.msra.mxu0 0.0
    %425 = vmatprep.subr.mxu0 0.0
    %426 = vmatpush1.msra.mxu0 0.0
    %427 = vmatprep.subr.mxu0 0.0
    %428 = vmatpush1.msra.mxu0 0.0
    %429 = vmatprep.subr.mxu0 0.0
    %430 = vmatpush1.msra.mxu0 0.0
    %431 = vmatprep.subr.mxu0 0.0
    %432 = vmatpush1.msra.mxu0 0.0
    %433 = vmatprep.subr.mxu0 0.0
    %434 = vmatpush1.msra.mxu0 0.0
    %435 = vmatprep.subr.mxu0 0.0
    %436 = vmatpush1.msra.mxu0 0.0
    %437 = vmatprep.subr.mxu0 0.0
    %438 = vmatpush1.msra.mxu0 0.0
    %439 = vmatprep.subr.mxu0 0.0
    %440 = vmatpush1.msra.mxu0 0.0
    %441 = vmatprep.subr.mxu0 0.0
    %442 = vmatpush1.msra.mxu0 0.0
    %443 = vmatprep.subr.mxu0 0.0
    %444 = vmatpush1.msra.mxu0 0.0
    %445 = vmatprep.subr.mxu0 0.0
    %446 = vmatpush1.msra.mxu0 0.0
    %447 = vmatprep.subr.mxu0 0.0
    %448 = vmatpush1.msra.mxu0 0.0
    %449 = vmatprep.subr.mxu0 0.0
    %450 = vmatpush1.msra.mxu0 0.0
    %451 = vmatprep.subr.mxu0 0.0
    %452 = vmatpush1.msra.mxu0 0.0
    %453 = vmatprep.subr.mxu0 0.0
    %454 = vmatpush1.msra.mxu0 0.0
    %455 = vmatprep.mubr.f32.mxu0 0.0
    %456 = vmatmul.mubr.f32.gmra.mrb[0].mxu0 %v318
    %v457 = vpop.f32.mrb[0].mxu0
    %v458 = vadd.f32 %v314, %v457
    %v459 = vpop.f32.mrb[0].mxu0
    %v460 = vadd.f32 %v314, %v459
    %461 = vdwg.mxu0
    %462 = vst [vmem:[#allocation7] sm:$0xff] %v387
    %463 = vst [vmem:[#allocation7 + $0x8] sm:$0xff] %v389
    %s464 = scalar_lea.vmem [#allocation7], 16
    %465 = vst [vmem:[%s464] sm:$0xff] %v458
    %466 = vst [vmem:[%s464 + $0x8] sm:$0xff] %v460
    // Predicated region
    $region18: #{tpu_custom_call.1} parent=1 // pred_check
      _
    $region19: #{tpu_custom_call.1} parent=1 // pred_check_branch
      %468 = sbr.rel (0) target = $region21
    $region20: #{tpu_custom_call.1} parent=1 // pred_region
      %s470 = ssub.s32 512, 512
      %471 = vsyncadd [#allocation6], %s470
      %s472 = sshll.u32 [#allocation7], 4
      %s473 = int_to_ptr.vmem [resolvable:$true] %s472
      %478 = dma.vmem_to_hbm [thread:$0]  %s473, 512, %s3, [#allocation6], 256, 256, 16
    $region21: #{tpu_custom_call.1} parent=1 // pred_fallthru
      _
    // Predicated region
    $region22: #{tpu_custom_call.1} parent=1 // pred_check
      _
    $region23: #{tpu_custom_call.1} parent=1 // pred_check_branch
      %480 = sbr.rel (0) target = $region25
    $region24: #{tpu_custom_call.1} parent=1 // pred_region
      %481 = dma.done [#allocation6], 512
    $region25: #{tpu_custom_call.1} parent=1 // pred_fallthru
      _
    %482 = vsyncpa [#allocation5], 1
    %483 = vsyncpa [#allocation6], 1

</llo_original>
